<compile_context>
chip_gen: v6e
topology: v6e:2x2x1
jax: 0.10.0
libtpu: 0.0.40
codegen_flags: <defaults>
</compile_context>

<pallas_src>
import functools

import jax
import jax.numpy as jnp
from jax.experimental import pallas as pl
from jax.experimental.pallas import tpu as pltpu


def _fused_focal_kernel(seg_logit_ref, seg_raw_ref, occ_logit_ref, occ_raw_ref,
                        out_ref, *, n_valid, rows_tile, acc_rows, split,
                        tiles_per_split, need_mask, occ_threshold):
    """One (batch, core-split, pixel-tile) grid step of both focal losses.

    Block shapes:
      seg_logit_ref / occ_logit_ref : (1, 2, rows_tile, 128)
      seg_raw_ref   / occ_raw_ref   : (1, 1, rows_tile, 128)
      out_ref                       : (1, 1, 2, acc_rows, 128)  resident acc
    """
    s = pl.program_id(1)
    t = pl.program_id(2)

    @pl.when(t == 0)
    def _():
        out_ref[...] = jnp.zeros_like(out_ref)

    def binary_focal(x0, x1, y_true):
        # gamma=2 focal term of a 2-class softmax, per pixel:
        #   m = logit margin of the true class
        #   1 - p_y = sigmoid(-m),   -log p_y = softplus(-m)
        #   loss    = (1 - p_y)^2 * (-log p_y)
        d = x1.astype(jnp.float32) - x0.astype(jnp.float32)
        m = jnp.where(y_true, d, -d)
        e = jnp.exp(-jnp.abs(m))                       # exp(-|m|) in (0,1]
        one_plus = 1.0 + e
        inv = pl.reciprocal(one_plus)                  # exact; EUP, not VALU div
        p_not = jnp.where(m >= 0.0, e, 1.0) * inv      # sigmoid(-m)
        nll = jnp.maximum(-m, 0.0) + jnp.log(one_plus)  # softplus(-m)
        return (p_not * p_not) * nll

    # in-kernel label derivation (no int label arrays in HBM)
    seg_y = seg_raw_ref[0, 0] != 0
    occ_y = occ_raw_ref[0, 0].astype(jnp.float32) > occ_threshold

    seg_px = binary_focal(seg_logit_ref[0, 0], seg_logit_ref[0, 1], seg_y)
    occ_px = binary_focal(occ_logit_ref[0, 0], occ_logit_ref[0, 1], occ_y)

    reduce_factor = rows_tile // acc_rows

    def accumulate(seg_v, occ_v):
        # reduce tile -> (acc_rows, 128) with adds across vregs (VPU only)
        if reduce_factor > 1:
            seg_v = jnp.sum(seg_v.reshape(reduce_factor, acc_rows, 128), axis=0)
            occ_v = jnp.sum(occ_v.reshape(reduce_factor, acc_rows, 128), axis=0)
        out_ref[0, 0, 0] += seg_v
        out_ref[0, 0, 1] += occ_v

    if need_mask:  # static Python bool: only emitted when padding/tail exists
        is_last = jnp.logical_and(s == split - 1, t == tiles_per_split - 1)

        @pl.when(is_last)
        def _():
            row = jax.lax.broadcasted_iota(jnp.int32, (rows_tile, 128), 0)
            lane = jax.lax.broadcasted_iota(jnp.int32, (rows_tile, 128), 1)
            gtile = s * tiles_per_split + t
            idx = gtile * (rows_tile * 128) + row * 128 + lane
            valid = idx < n_valid
            # jnp.where SELECTS, so NaN/Inf from out-of-bounds tail garbage
            # can never leak into the accumulator (multiply-by-0 would).
            accumulate(jnp.where(valid, seg_px, 0.0),
                       jnp.where(valid, occ_px, 0.0))

        @pl.when(jnp.logical_not(is_last))
        def _():
            accumulate(seg_px, occ_px)
    else:
        accumulate(seg_px, occ_px)


def fused_focal_losses(seg_logits, gt_seg_label, occ_logits, obj_mask, *,
                       occ_threshold=0.3, max_rows_per_tile=1024):
    """Returns (mean seg focal loss, mean occ focal loss) — both un-weighted."""
    B, C, H, W = seg_logits.shape
    assert C == 2, "kernel is specialized to the binary (2-class) softmax"
    assert occ_logits.shape == (B, C, H, W)
    N = H * W

    # fold pixels onto (rows, 128) = (sublane, lane)
    rows = -(-N // 128)
    pad_n = rows * 128 - N          # only the <=127-element lane remainder

    if rows > max_rows_per_tile:
        rows_tile = max(8, (max_rows_per_tile // 8) * 8)   # must be 8-aligned
    else:
        rows_tile = rows                                   # full dim -> always legal
    num_tiles = -(-rows // rows_tile)

    # v7x: a single batch element cannot feed both TensorCores via the batch
    # axis alone; add a size-2 "parallel" split over the tile range when it
    # divides evenly (neutral on v5e/v6e).
    split = 2 if (B == 1 and num_tiles >= 2 and num_tiles % 2 == 0) else 1
    tiles_per_split = num_tiles // split

    # mask needed iff lane remainder padded or last row-tile is partial;
    # in both cases all invalid pixels live in the last global tile.
    need_mask = (pad_n > 0) or (rows % rows_tile != 0)

    acc_rows = 8 if rows_tile % 8 == 0 else rows_tile

    def fold(x, channels):
        x = x.reshape(B, channels, N)
        if pad_n:  # small lane-remainder pad only; no rounding to tile size
            x = jnp.pad(x, ((0, 0), (0, 0), (0, pad_n)))
        return x.reshape(B, channels, rows, 128)

    seg_logits_f = fold(seg_logits, C)
    occ_logits_f = fold(occ_logits, C)
    seg_raw_f = fold(gt_seg_label, 1)
    occ_raw_f = fold(obj_mask[:, :1], 1)

    kernel = functools.partial(
        _fused_focal_kernel,
        n_valid=N, rows_tile=rows_tile, acc_rows=acc_rows, split=split,
        tiles_per_split=tiles_per_split, need_mask=need_mask,
        occ_threshold=float(occ_threshold))

    def in_blk(c):
        return pl.BlockSpec((1, c, rows_tile, 128),
                            lambda b, s, t: (b, 0, s * tiles_per_split + t, 0))

    out_spec = pl.BlockSpec((1, 1, 2, acc_rows, 128),
                            lambda b, s, t: (b, s, 0, 0, 0))

    partials = pl.pallas_call(
        kernel,
        out_shape=jax.ShapeDtypeStruct((B, split, 2, acc_rows, 128),
                                       jnp.float32),
        grid_spec=pltpu.PrefetchScalarGridSpec(
            num_scalar_prefetch=0,
            grid=(B, split, tiles_per_split),
            in_specs=[in_blk(C), in_blk(1), in_blk(C), in_blk(1)],
            out_specs=out_spec),
        compiler_params=pltpu.CompilerParams(
            dimension_semantics=("parallel", "parallel", "arbitrary")),
    )(seg_logits_f, seg_raw_f, occ_logits_f, occ_raw_f)

    # final tiny reduction + mean (NLLLoss reduction='mean' over B*H*W pixels)
    inv_total = 1.0 / float(B * N)
    loss_seg = jnp.sum(partials[:, :, 0]) * inv_total
    loss_occ = jnp.sum(partials[:, :, 1]) * inv_total
    return loss_seg, loss_occ


@functools.partial(jax.jit, static_argnames=("max_rows_per_tile",))
def loss_function_forward(prob_map_logit, occ_prob_map_logit, obj_mask,
                          gt_seg_label, *, max_rows_per_tile=1024):
    """Pallas re-implementation of Loss_Function.forward -> loss_dict."""
    loss_seg, loss_occ = fused_focal_losses(
        prob_map_logit, gt_seg_label, occ_prob_map_logit, obj_mask,
        max_rows_per_tile=max_rows_per_tile)
    loss_seg = loss_seg * 10.0
    loss_sum = loss_seg + loss_occ
    return {"seg": loss_seg, "occ": loss_occ, "sum": loss_sum}


def _focal_ref(logits, labels, gamma=2.0):
    """Pure-JAX reference (mirrors the PyTorch SoftmaxFocalLoss)."""
    p = jax.nn.softmax(logits, axis=1)
    logp = jax.nn.log_softmax(logits, axis=1)
    w = ((1.0 - p) ** gamma) * logp
    picked = jnp.take_along_axis(w, labels[:, None].astype(jnp.int32), axis=1)[:, 0]
    return -jnp.mean(picked)


if __name__ == "__main__":
    key = jax.random.PRNGKey(0)

    def run_case(B, H, W, max_rows_per_tile=1024, logit_dtype=jnp.float32):
        ks = jax.random.split(jax.random.fold_in(key, B * 100000 + H * 1000 + W), 4)
        prob_map_logit = jax.random.normal(ks[0], (B, 2, H, W),
                                           dtype=jnp.float32).astype(logit_dtype)
        occ_prob_map_logit = jax.random.normal(ks[1], (B, 2, H, W),
                                               dtype=jnp.float32).astype(logit_dtype)
        obj_mask = jax.random.uniform(ks[2], (B, 1, H, W), dtype=jnp.float32)
        gt_seg_label = (jax.random.uniform(ks[3], (B, H, W)) > 0.7).astype(jnp.float32)

        out = loss_function_forward(prob_map_logit, occ_prob_map_logit,
                                    obj_mask, gt_seg_label,
                                    max_rows_per_tile=max_rows_per_tile)
        jax.block_until_ready(out)

        seg_lab = (gt_seg_label != 0).astype(jnp.int32)
        occ_lab = (obj_mask[:, 0] > 0.3).astype(jnp.int32)
        ref_seg = _focal_ref(prob_map_logit.astype(jnp.float32), seg_lab) * 10.0
        ref_occ = _focal_ref(occ_prob_map_logit.astype(jnp.float32), occ_lab)
        assert jnp.allclose(out["seg"], ref_seg, rtol=1e-4, atol=1e-5), (out["seg"], ref_seg)
        assert jnp.allclose(out["occ"], ref_occ, rtol=1e-4, atol=1e-5), (out["occ"], ref_occ)
        assert jnp.allclose(out["sum"], ref_seg + ref_occ, rtol=1e-4, atol=1e-5)

    # lane-aligned single-tile case (no pad, no mask)
    run_case(B=2, H=16, W=32)
    # ragged pixel count -> small lane-remainder pad + in-kernel mask
    run_case(B=2, H=15, W=17)
    # multi-tile with a partial (OOB) tail row-tile, masked via jnp.where
    run_case(B=2, H=40, W=48, max_rows_per_tile=8)
    # B=1 path: size-2 "parallel" split over tiles (feeds both v7x TCs)
    run_case(B=1, H=64, W=64, max_rows_per_tile=8)
    # bf16 logits + in-kernel tile->(8,128) reshape-sum accumulation
    run_case(B=2, H=64, W=64, max_rows_per_tile=16, logit_dtype=jnp.bfloat16)

    # The pickled basis U (self.U) is loaded from disk in the original module
    # but is unused by forward(); it is intentionally not reproduced here.
    # TODO(synk): IoU / row-label / regionprops helper methods are not part of
    # forward() and are not implemented.

    print("KERNEL_OK")
</pallas_src>

<mosaic_0001>
module attributes {stable_mosaic.version = 11 : i64} {
  func.func @_fused_focal_kernel(%arg0: i32, %arg1: i32, %arg2: i32, %arg3: memref<1x2x4x128xf32, #tpu.memory_space<vmem>>, %arg4: memref<1x1x4x128xf32, #tpu.memory_space<vmem>>, %arg5: memref<1x2x4x128xf32, #tpu.memory_space<vmem>>, %arg6: memref<1x1x4x128xf32, #tpu.memory_space<vmem>>, %arg7: memref<1x1x2x4x128xf32, #tpu.memory_space<vmem>>) attributes {dimension_semantics = [#tpu.dimension_semantics<parallel>, #tpu.dimension_semantics<parallel>, #tpu.dimension_semantics<arbitrary>], iteration_bounds = array<i64: 2, 1, 1>, scalar_prefetch = 0 : i64, scratch_operands = 0 : i64, tpu.core_type = #tpu.core_type<tc>, window_params = [{transform_indices = @transform_0, window_bounds = array<i64: 1, 2, 4, 128>}, {transform_indices = @transform_1, window_bounds = array<i64: 1, 1, 4, 128>}, {transform_indices = @transform_2, window_bounds = array<i64: 1, 2, 4, 128>}, {transform_indices = @transform_3, window_bounds = array<i64: 1, 1, 4, 128>}, {transform_indices = @transform_4, window_bounds = array<i64: 1, 1, 2, 4, 128>}]} {
    %c0_i32 = arith.constant 0 : i32
    %0 = arith.cmpi eq, %arg2, %c0_i32 : i32
    %1 = arith.extui %0 : i1 to i32
    %c0_i32_0 = arith.constant 0 : i32
    %2 = arith.cmpi ne, %1, %c0_i32_0 : i32
    scf.if %2 {
      %cst_58 = arith.constant 0.000000e+00 : f32
      %79 = vector.broadcast %cst_58 : f32 to vector<1x1x2x4x128xf32>
      %c0_59 = arith.constant 0 : index
      %c0_60 = arith.constant 0 : index
      %c0_61 = arith.constant 0 : index
      %c0_62 = arith.constant 0 : index
      %c0_63 = arith.constant 0 : index
      %80 = vector.load %arg7[%c0_59, %c0_60, %c0_61, %c0_62, %c0_63] : memref<1x1x2x4x128xf32, #tpu.memory_space<vmem>>, vector<1x1x2x4x128xf32>
      tpu.vector_store %arg7[%c0_59, %c0_60, %c0_61, %c0_62, %c0_63], %79 {strides = array<i32>} : memref<1x1x2x4x128xf32, #tpu.memory_space<vmem>>, vector<1x1x2x4x128xf32>,
    } else {
    }
    %c0 = arith.constant 0 : index
    %c0_1 = arith.constant 0 : index
    %c0_2 = arith.constant 0 : index
    %c0_3 = arith.constant 0 : index
    %3 = vector.load %arg4[%c0, %c0_1, %c0_2, %c0_3] : memref<1x1x4x128xf32, #tpu.memory_space<vmem>>, vector<1x1x4x128xf32>
    %4 = vector.shape_cast %3 : vector<1x1x4x128xf32> to vector<4x128xf32>
    %cst = arith.constant 0.000000e+00 : f32
    %5 = vector.broadcast %cst : f32 to vector<4x128xf32>
    %6 = arith.cmpf one, %4, %5 : vector<4x128xf32>
    %c0_4 = arith.constant 0 : index
    %c0_5 = arith.constant 0 : index
    %c0_6 = arith.constant 0 : index
    %c0_7 = arith.constant 0 : index
    %7 = vector.load %arg6[%c0_4, %c0_5, %c0_6, %c0_7] : memref<1x1x4x128xf32, #tpu.memory_space<vmem>>, vector<1x1x4x128xf32>
    %8 = vector.shape_cast %7 : vector<1x1x4x128xf32> to vector<4x128xf32>
    %cst_8 = arith.constant 3.000000e-01 : f32
    %9 = vector.broadcast %cst_8 : f32 to vector<4x128xf32>
    %10 = arith.cmpf ogt, %8, %9 : vector<4x128xf32>
    %c0_9 = arith.constant 0 : index
    %c0_10 = arith.constant 0 : index
    %c0_11 = arith.constant 0 : index
    %c0_12 = arith.constant 0 : index
    %11 = vector.load %arg3[%c0_9, %c0_10, %c0_11, %c0_12] : memref<1x2x4x128xf32, #tpu.memory_space<vmem>>, vector<1x1x4x128xf32>
    %12 = vector.shape_cast %11 : vector<1x1x4x128xf32> to vector<4x128xf32>
    %c0_13 = arith.constant 0 : index
    %c1 = arith.constant 1 : index
    %c0_14 = arith.constant 0 : index
    %c0_15 = arith.constant 0 : index
    %13 = vector.load %arg3[%c0_13, %c1, %c0_14, %c0_15] : memref<1x2x4x128xf32, #tpu.memory_space<vmem>>, vector<1x1x4x128xf32>
    %14 = vector.shape_cast %13 : vector<1x1x4x128xf32> to vector<4x128xf32>
    %15 = arith.subf %14, %12 : vector<4x128xf32>
    %cst_16 = arith.constant 0.000000e+00 : f32
    %16 = vector.broadcast %cst_16 : f32 to vector<4x128xf32>
    %17 = arith.subf %16, %15 : vector<4x128xf32>
    %18 = arith.select %6, %15, %17 : vector<4x128xi1>, vector<4x128xf32>
    %19 = math.absf %18 : vector<4x128xf32>
    %cst_17 = arith.constant 0.000000e+00 : f32
    %20 = vector.broadcast %cst_17 : f32 to vector<4x128xf32>
    %21 = arith.subf %20, %19 : vector<4x128xf32>
    %22 = math.exp %21 : vector<4x128xf32>
    %cst_18 = arith.constant 1.000000e+00 : f32
    %23 = vector.broadcast %cst_18 : f32 to vector<4x128xf32>
    %24 = arith.addf %23, %22 : vector<4x128xf32>
    %25 = tpu.reciprocal %24 : vector<4x128xf32> -> vector<4x128xf32>
    %cst_19 = arith.constant 0.000000e+00 : f32
    %26 = vector.broadcast %cst_19 : f32 to vector<4x128xf32>
    %27 = arith.cmpf oge, %18, %26 : vector<4x128xf32>
    %cst_20 = arith.constant 1.000000e+00 : f32
    %28 = vector.broadcast %cst_20 : f32 to vector<4x128xf32>
    %29 = arith.select %27, %22, %28 : vector<4x128xi1>, vector<4x128xf32>
    %30 = arith.mulf %29, %25 : vector<4x128xf32>
    %cst_21 = arith.constant 0.000000e+00 : f32
    %31 = vector.broadcast %cst_21 : f32 to vector<4x128xf32>
    %32 = arith.subf %31, %18 : vector<4x128xf32>
    %cst_22 = arith.constant 0.000000e+00 : f32
    %33 = vector.broadcast %cst_22 : f32 to vector<4x128xf32>
    %34 = arith.maximumf %32, %33 : vector<4x128xf32>
    %35 = math.log %24 : vector<4x128xf32>
    %36 = arith.addf %34, %35 : vector<4x128xf32>
    %37 = arith.mulf %30, %30 : vector<4x128xf32>
    %38 = arith.mulf %37, %36 : vector<4x128xf32>
    %c0_23 = arith.constant 0 : index
    %c0_24 = arith.constant 0 : index
    %c0_25 = arith.constant 0 : index
    %c0_26 = arith.constant 0 : index
    %39 = vector.load %arg5[%c0_23, %c0_24, %c0_25, %c0_26] : memref<1x2x4x128xf32, #tpu.memory_space<vmem>>, vector<1x1x4x128xf32>
    %40 = vector.shape_cast %39 : vector<1x1x4x128xf32> to vector<4x128xf32>
    %c0_27 = arith.constant 0 : index
    %c1_28 = arith.constant 1 : index
    %c0_29 = arith.constant 0 : index
    %c0_30 = arith.constant 0 : index
    %41 = vector.load %arg5[%c0_27, %c1_28, %c0_29, %c0_30] : memref<1x2x4x128xf32, #tpu.memory_space<vmem>>, vector<1x1x4x128xf32>
    %42 = vector.shape_cast %41 : vector<1x1x4x128xf32> to vector<4x128xf32>
    %43 = arith.subf %42, %40 : vector<4x128xf32>
    %cst_31 = arith.constant 0.000000e+00 : f32
    %44 = vector.broadcast %cst_31 : f32 to vector<4x128xf32>
    %45 = arith.subf %44, %43 : vector<4x128xf32>
    %46 = arith.select %10, %43, %45 : vector<4x128xi1>, vector<4x128xf32>
    %47 = math.absf %46 : vector<4x128xf32>
    %cst_32 = arith.constant 0.000000e+00 : f32
    %48 = vector.broadcast %cst_32 : f32 to vector<4x128xf32>
    %49 = arith.subf %48, %47 : vector<4x128xf32>
    %50 = math.exp %49 : vector<4x128xf32>
    %cst_33 = arith.constant 1.000000e+00 : f32
    %51 = vector.broadcast %cst_33 : f32 to vector<4x128xf32>
    %52 = arith.addf %51, %50 : vector<4x128xf32>
    %53 = tpu.reciprocal %52 : vector<4x128xf32> -> vector<4x128xf32>
    %cst_34 = arith.constant 0.000000e+00 : f32
    %54 = vector.broadcast %cst_34 : f32 to vector<4x128xf32>
    %55 = arith.cmpf oge, %46, %54 : vector<4x128xf32>
    %cst_35 = arith.constant 1.000000e+00 : f32
    %56 = vector.broadcast %cst_35 : f32 to vector<4x128xf32>
    %57 = arith.select %55, %50, %56 : vector<4x128xi1>, vector<4x128xf32>
    %58 = arith.mulf %57, %53 : vector<4x128xf32>
    %cst_36 = arith.constant 0.000000e+00 : f32
    %59 = vector.broadcast %cst_36 : f32 to vector<4x128xf32>
    %60 = arith.subf %59, %46 : vector<4x128xf32>
    %cst_37 = arith.constant 0.000000e+00 : f32
    %61 = vector.broadcast %cst_37 : f32 to vector<4x128xf32>
    %62 = arith.maximumf %60, %61 : vector<4x128xf32>
    %63 = math.log %52 : vector<4x128xf32>
    %64 = arith.addf %62, %63 : vector<4x128xf32>
    %65 = arith.mulf %58, %58 : vector<4x128xf32>
    %66 = arith.mulf %65, %64 : vector<4x128xf32>
    %c0_38 = arith.constant 0 : index
    %c0_39 = arith.constant 0 : index
    %c0_40 = arith.constant 0 : index
    %c0_41 = arith.constant 0 : index
    %c0_42 = arith.constant 0 : index
    %67 = vector.load %arg7[%c0_38, %c0_39, %c0_40, %c0_41, %c0_42] : memref<1x1x2x4x128xf32, #tpu.memory_space<vmem>>, vector<1x1x1x4x128xf32>
    %68 = vector.shape_cast %67 : vector<1x1x1x4x128xf32> to vector<4x128xf32>
    %69 = arith.addf %68, %38 : vector<4x128xf32>
    %c0_43 = arith.constant 0 : index
    %c0_44 = arith.constant 0 : index
    %c0_45 = arith.constant 0 : index
    %c0_46 = arith.constant 0 : index
    %c0_47 = arith.constant 0 : index
    %70 = vector.load %arg7[%c0_43, %c0_44, %c0_45, %c0_46, %c0_47] : memref<1x1x2x4x128xf32, #tpu.memory_space<vmem>>, vector<1x1x1x4x128xf32>
    %71 = vector.shape_cast %70 : vector<1x1x1x4x128xf32> to vector<4x128xf32>
    %72 = vector.shape_cast %69 : vector<4x128xf32> to vector<1x1x1x4x128xf32>
    tpu.vector_store %arg7[%c0_43, %c0_44, %c0_45, %c0_46, %c0_47], %72 {strides = array<i32>} : memref<1x1x2x4x128xf32, #tpu.memory_space<vmem>>, vector<1x1x1x4x128xf32>,
    %c0_48 = arith.constant 0 : index
    %c0_49 = arith.constant 0 : index
    %c1_50 = arith.constant 1 : index
    %c0_51 = arith.constant 0 : index
    %c0_52 = arith.constant 0 : index
    %73 = vector.load %arg7[%c0_48, %c0_49, %c1_50, %c0_51, %c0_52] : memref<1x1x2x4x128xf32, #tpu.memory_space<vmem>>, vector<1x1x1x4x128xf32>
    %74 = vector.shape_cast %73 : vector<1x1x1x4x128xf32> to vector<4x128xf32>
    %75 = arith.addf %74, %66 : vector<4x128xf32>
    %c0_53 = arith.constant 0 : index
    %c0_54 = arith.constant 0 : index
    %c1_55 = arith.constant 1 : index
    %c0_56 = arith.constant 0 : index
    %c0_57 = arith.constant 0 : index
    %76 = vector.load %arg7[%c0_53, %c0_54, %c1_55, %c0_56, %c0_57] : memref<1x1x2x4x128xf32, #tpu.memory_space<vmem>>, vector<1x1x1x4x128xf32>
    %77 = vector.shape_cast %76 : vector<1x1x1x4x128xf32> to vector<4x128xf32>
    %78 = vector.shape_cast %75 : vector<4x128xf32> to vector<1x1x1x4x128xf32>
    tpu.vector_store %arg7[%c0_53, %c0_54, %c1_55, %c0_56, %c0_57], %78 {strides = array<i32>} : memref<1x1x2x4x128xf32, #tpu.memory_space<vmem>>, vector<1x1x1x4x128xf32>,
    return
  }
  func.func @transform_0(%arg0: i32, %arg1: i32, %arg2: i32) -> (i32, i32, i32, i32) {
    %c1_i32 = arith.constant 1 : i32
    %0 = arith.muli %arg1, %c1_i32 : i32
    %1 = arith.addi %0, %arg2 : i32
    %c0_i32 = arith.constant 0 : i32
    %c0_i32_0 = arith.constant 0 : i32
    %c0_i32_1 = arith.constant 0 : i32
    return %arg0, %c0_i32, %1, %c0_i32_0 : i32, i32, i32, i32
  }
  func.func @transform_1(%arg0: i32, %arg1: i32, %arg2: i32) -> (i32, i32, i32, i32) {
    %c1_i32 = arith.constant 1 : i32
    %0 = arith.muli %arg1, %c1_i32 : i32
    %1 = arith.addi %0, %arg2 : i32
    %c0_i32 = arith.constant 0 : i32
    %c0_i32_0 = arith.constant 0 : i32
    %c0_i32_1 = arith.constant 0 : i32
    return %arg0, %c0_i32, %1, %c0_i32_0 : i32, i32, i32, i32
  }
  func.func @transform_2(%arg0: i32, %arg1: i32, %arg2: i32) -> (i32, i32, i32, i32) {
    %c1_i32 = arith.constant 1 : i32
    %0 = arith.muli %arg1, %c1_i32 : i32
    %1 = arith.addi %0, %arg2 : i32
    %c0_i32 = arith.constant 0 : i32
    %c0_i32_0 = arith.constant 0 : i32
    %c0_i32_1 = arith.constant 0 : i32
    return %arg0, %c0_i32, %1, %c0_i32_0 : i32, i32, i32, i32
  }
  func.func @transform_3(%arg0: i32, %arg1: i32, %arg2: i32) -> (i32, i32, i32, i32) {
    %c1_i32 = arith.constant 1 : i32
    %0 = arith.muli %arg1, %c1_i32 : i32
    %1 = arith.addi %0, %arg2 : i32
    %c0_i32 = arith.constant 0 : i32
    %c0_i32_0 = arith.constant 0 : i32
    %c0_i32_1 = arith.constant 0 : i32
    return %arg0, %c0_i32, %1, %c0_i32_0 : i32, i32, i32, i32
  }
  func.func @transform_4(%arg0: i32, %arg1: i32, %arg2: i32) -> (i32, i32, i32, i32, i32) {
    %c0_i32 = arith.constant 0 : i32
    %c0_i32_0 = arith.constant 0 : i32
    %c0_i32_1 = arith.constant 0 : i32
    %c0_i32_2 = arith.constant 0 : i32
    return %arg0, %arg1, %c0_i32, %c0_i32_0, %c0_i32_1 : i32, i32, i32, i32, i32
  }
}

</mosaic_0001>

<llo_original>
// kernel: loss_function_forward.1
$region0: #{loss_function_forward.1}
  #allocation0 [shape = 'u32[]', space=smem, size = 0x4, offset = 0x4, fixed_abs, tag = 'smem constant byte address 0x4 - core index']
  #allocation1 [shape = 'u32[144,128]{1,0:T(1,128)}', space=vmem, size = 0x12000, scoped, tag = 'internal scratch']
  %s0 = inlined_call_operand.vmem [shape: f32[2,2,4,128], index: 0, kind: input, shape index: {}]
  %s1 = inlined_call_operand.vmem [shape: f32[2,1,4,128], index: 1, kind: input, shape index: {}]
  %s2 = inlined_call_operand.vmem [shape: f32[2,2,4,128], index: 2, kind: input, shape index: {}]
  %s3 = inlined_call_operand.vmem [shape: f32[2,1,4,128], index: 3, kind: input, shape index: {}]
  %s4 = inlined_call_operand.vmem [shape: f32[2,1,2,4,128], index: 4, kind: output, shape index: {}]
  %s5 = sld [smem:[#allocation0]]
  $region53: #{loss_function_forward.1} parent=0
    _
  %s7 = ssub.s32 1, %s5
  %s8 = scalar_select 0, %s7, %s5
  loop: start=0, step=1, limit=4
  $region2: #{loss_function_forward.1} parent=0 // loop_pre_header
    _
  $region3: #{loss_function_forward.1} parent=0 // loop_header
    %s10 = sphi 0, %s14
    %p11 = scmp.ge.s32.totalorder %s10, 4
    %s17 = sphi 0, %s36
    %s18 = sphi 0, %s32
    %s19 = sphi 0, %s28
    %s20 = sphi 0, %s17
    %s21 = sphi 0, %s18
    %s22 = sphi 0, %s19
    %s23 = sphi 0, %s20
    %s24 = sphi 0, %s21
    %s25 = sphi 0, %s22
    %s43 = sphi 0, %s45
    %s46 = sphi 0, %s43
    %s47 = sphi 0, %s46
    %s63 = sphi 0, %s47
    %s73 = sphi 0, %s75
    %s76 = sphi 0, %s73
    %s77 = sphi 0, %s76
    %s93 = sphi 0, %s77
    %s103 = sphi 0, %s105
    %s106 = sphi 0, %s103
    %s107 = sphi 0, %s106
    %s123 = sphi 0, %s107
    %s133 = sphi 0, %s135
    %s136 = sphi 0, %s133
    %s137 = sphi 0, %s136
    %s153 = sphi 0, %s137
    %s161 = sphi 0, %s163
    %s164 = sphi 0, %s161
    %s165 = sphi 0, %s164
    %s181 = sphi 0, %s165
  $region4: #{loss_function_forward.1} parent=0 // loop_header_branch
    %13 = sbr.rel (%p11) target = $region8
  $region5: #{loss_function_forward.1} parent=0 // loop_body
    %s15 = ssub.s32 %s10, 1
    %s16 = ssub.s32 %s10, 2
    %s26 = sadd.s32 1, %s19
    %p27 = scmp.ge.s32.totalorder %s26, 1
    %s28 = scalar_select %p27, 0, %s26
    %s29 = sadd.s32 1, %s18
    %s30 = scalar_select %p27, %s29, %s18
    %p31 = scmp.ge.s32.totalorder %s30, 1
    %s32 = scalar_select %p31, 0, %s30
    %s33 = sadd.s32 1, %s17
    %s34 = scalar_select %p31, %s33, %s17
    %p35 = scmp.ge.s32.totalorder %s34, 2
    %s36 = scalar_select %p35, 0, %s34
    %s37 = sadd.s32 %s18, %s19
    %s38 = sadd.s32 %s32, %s28
    %s39 = ssub.s32 %s17, %s36
    %s40 = ssub.s32 %s37, %s38
    %s41 = sor.u32 %s39, %s40
    %p42 = scmp.eq.s32.totalorder %s41, 0
    %s44 = sadd.s32 %s43, 1
    %s45 = scalar_select %p42, %s43, %s44
    %p48 = pneg %p42
    %p49 = scmp.eq.s32.totalorder %s10, 1
    %p50 = por %p48, %p49
    %p51 = scmp.ne.s32.totalorder %s43, %s46
    %p52 = scmp.eq.s32.totalorder %s10, 0
    %p53 = por %p51, %p52
    %p54 = scmp.ne.s32.totalorder %s43, %s46
    %p55 = scmp.eq.s32.totalorder %s15, 1
    %p56 = por %p54, %p55
    %p57 = scmp.ne.s32.totalorder %s46, %s47
    %p58 = scmp.eq.s32.totalorder %s15, 0
    %p59 = por %p57, %p58
    %p60 = scmp.ne.s32.totalorder %s46, %s47
    %p61 = scmp.eq.s32.totalorder %s16, 1
    %p62 = por %p60, %p61
    %p64 = scmp.ne.s32.totalorder %s47, %s63
    %p65 = scmp.eq.s32.totalorder %s16, 0
    %p66 = por %p64, %p65
    %s67 = sadd.s32 %s18, %s19
    %s68 = sadd.s32 %s32, %s28
    %s69 = ssub.s32 %s17, %s36
    %s70 = ssub.s32 %s67, %s68
    %s71 = sor.u32 %s69, %s70
    %p72 = scmp.eq.s32.totalorder %s71, 0
    %s74 = sadd.s32 %s73, 1
    %s75 = scalar_select %p72, %s73, %s74
    %p78 = pneg %p72
    %p79 = scmp.eq.s32.totalorder %s10, 1
    %p80 = por %p78, %p79
    %p81 = scmp.ne.s32.totalorder %s73, %s76
    %p82 = scmp.eq.s32.totalorder %s10, 0
    %p83 = por %p81, %p82
    %p84 = scmp.ne.s32.totalorder %s73, %s76
    %p85 = scmp.eq.s32.totalorder %s15, 1
    %p86 = por %p84, %p85
    %p87 = scmp.ne.s32.totalorder %s76, %s77
    %p88 = scmp.eq.s32.totalorder %s15, 0
    %p89 = por %p87, %p88
    %p90 = scmp.ne.s32.totalorder %s76, %s77
    %p91 = scmp.eq.s32.totalorder %s16, 1
    %p92 = por %p90, %p91
    %p94 = scmp.ne.s32.totalorder %s77, %s93
    %p95 = scmp.eq.s32.totalorder %s16, 0
    %p96 = por %p94, %p95
    %s97 = sadd.s32 %s18, %s19
    %s98 = sadd.s32 %s32, %s28
    %s99 = ssub.s32 %s17, %s36
    %s100 = ssub.s32 %s97, %s98
    %s101 = sor.u32 %s99, %s100
    %p102 = scmp.eq.s32.totalorder %s101, 0
    %s104 = sadd.s32 %s103, 1
    %s105 = scalar_select %p102, %s103, %s104
    %p108 = pneg %p102
    %p109 = scmp.eq.s32.totalorder %s10, 1
    %p110 = por %p108, %p109
    %p111 = scmp.ne.s32.totalorder %s103, %s106
    %p112 = scmp.eq.s32.totalorder %s10, 0
    %p113 = por %p111, %p112
    %p114 = scmp.ne.s32.totalorder %s103, %s106
    %p115 = scmp.eq.s32.totalorder %s15, 1
    %p116 = por %p114, %p115
    %p117 = scmp.ne.s32.totalorder %s106, %s107
    %p118 = scmp.eq.s32.totalorder %s15, 0
    %p119 = por %p117, %p118
    %p120 = scmp.ne.s32.totalorder %s106, %s107
    %p121 = scmp.eq.s32.totalorder %s16, 1
    %p122 = por %p120, %p121
    %p124 = scmp.ne.s32.totalorder %s107, %s123
    %p125 = scmp.eq.s32.totalorder %s16, 0
    %p126 = por %p124, %p125
    %s127 = sadd.s32 %s18, %s19
    %s128 = sadd.s32 %s32, %s28
    %s129 = ssub.s32 %s17, %s36
    %s130 = ssub.s32 %s127, %s128
    %s131 = sor.u32 %s129, %s130
    %p132 = scmp.eq.s32.totalorder %s131, 0
    %s134 = sadd.s32 %s133, 1
    %s135 = scalar_select %p132, %s133, %s134
    %p138 = pneg %p132
    %p139 = scmp.eq.s32.totalorder %s10, 1
    %p140 = por %p138, %p139
    %p141 = scmp.ne.s32.totalorder %s133, %s136
    %p142 = scmp.eq.s32.totalorder %s10, 0
    %p143 = por %p141, %p142
    %p144 = scmp.ne.s32.totalorder %s133, %s136
    %p145 = scmp.eq.s32.totalorder %s15, 1
    %p146 = por %p144, %p145
    %p147 = scmp.ne.s32.totalorder %s136, %s137
    %p148 = scmp.eq.s32.totalorder %s15, 0
    %p149 = por %p147, %p148
    %p150 = scmp.ne.s32.totalorder %s136, %s137
    %p151 = scmp.eq.s32.totalorder %s16, 1
    %p152 = por %p150, %p151
    %p154 = scmp.ne.s32.totalorder %s137, %s153
    %p155 = scmp.eq.s32.totalorder %s16, 0
    %p156 = por %p154, %p155
    %s157 = ssub.s32 %s17, %s36
    %s158 = ssub.s32 %s18, %s32
    %s159 = sor.u32 %s157, %s158
    %p160 = scmp.eq.s32.totalorder %s159, 0
    %s162 = sadd.s32 %s161, 1
    %s163 = scalar_select %p160, %s161, %s162
    %p166 = pneg %p160
    %p167 = scmp.eq.s32.totalorder %s10, 1
    %p168 = por %p166, %p167
    %p169 = scmp.ne.s32.totalorder %s161, %s164
    %p170 = scmp.eq.s32.totalorder %s10, 0
    %p171 = por %p169, %p170
    %p172 = scmp.ne.s32.totalorder %s161, %s164
    %p173 = scmp.eq.s32.totalorder %s15, 1
    %p174 = por %p172, %p173
    %p175 = scmp.ne.s32.totalorder %s164, %s165
    %p176 = scmp.eq.s32.totalorder %s15, 0
    %p177 = por %p175, %p176
    %p178 = scmp.ne.s32.totalorder %s164, %s165
    %p179 = scmp.eq.s32.totalorder %s16, 1
    %p180 = por %p178, %p179
    %p182 = scmp.ne.s32.totalorder %s165, %s181
    %p183 = scmp.eq.s32.totalorder %s16, 0
    %p184 = por %p182, %p183
    %p185 = scmp.le.s32.totalorder 1, %s10
    %p186 = scmp.lt.s32.totalorder %s10, 3
    %p187 = pnand %p185, %p186
    %p188 = pneg %p187
    // Predicated region
    $region9: #{loss_function_forward.1} parent=5 // pred_check
      _
    $region10: #{loss_function_forward.1} parent=5 // pred_check_branch
      %190 = sbr.rel (%p187) target = $region12
    $region11: #{loss_function_forward.1} parent=5 // pred_region
      %s191 = ssub.s32 %s10, 1
    $region12: #{loss_function_forward.1} parent=5 // pred_fallthru
      _
    %p192 = scmp.lt.s32.totalorder %s10, 2
    // Predicated region
    $region13: #{loss_function_forward.1} parent=5 // pred_check
      %p193 = pneg %p192
    $region14: #{loss_function_forward.1} parent=5 // pred_check_branch
      %195 = sbr.rel (%p193) target = $region16
    $region15: #{loss_function_forward.1} parent=5 // pred_region
      // Predicated region
      $region17: #{loss_function_forward.1} parent=15 // pred_check
        %p196 = pneg %p53
      $region18: #{loss_function_forward.1} parent=15 // pred_check_branch
        %198 = sbr.rel (%p196) target = $region20
      $region19: #{loss_function_forward.1} parent=15 // pred_region
        %s199 = sadd.s32 %s18, %s19
        %p200 = scmp.lt.s32.totalorder %s17, 1
        %s201 = scalar_select %p200, %s17, 1
        %p202 = scmp.lt.s32.totalorder %s199, 0
        %s203 = scalar_select %p202, %s199, 0
        %s204 = smul.addr %s201, 2
        %s205 = sadd.s32 %s203, %s204
        %s206 = smul.addr %s205, 4
        %s207 = scalar_lea.vmem %s0, %s206
        %s208 = sadd.s32 %s18, %s19
      $region20: #{loss_function_forward.1} parent=15 // pred_fallthru
        _
      // Predicated region
      $region21: #{loss_function_forward.1} parent=15 // pred_check
        %p209 = pneg %p83
      $region22: #{loss_function_forward.1} parent=15 // pred_check_branch
        %211 = sbr.rel (%p209) target = $region24
      $region23: #{loss_function_forward.1} parent=15 // pred_region
        %s212 = sadd.s32 %s18, %s19
        %p213 = scmp.lt.s32.totalorder %s17, 1
        %s214 = scalar_select %p213, %s17, 1
        %p215 = scmp.lt.s32.totalorder %s212, 0
        %s216 = scalar_select %p215, %s212, 0
        %s217 = sadd.s32 %s216, %s214
        %s218 = smul.addr %s217, 4
        %s219 = scalar_lea.vmem %s1, %s218
        %s220 = sadd.s32 %s18, %s19
      $region24: #{loss_function_forward.1} parent=15 // pred_fallthru
        _
      // Predicated region
      $region25: #{loss_function_forward.1} parent=15 // pred_check
        %p221 = pneg %p113
      $region26: #{loss_function_forward.1} parent=15 // pred_check_branch
        %223 = sbr.rel (%p221) target = $region28
      $region27: #{loss_function_forward.1} parent=15 // pred_region
        %s224 = sadd.s32 %s18, %s19
        %p225 = scmp.lt.s32.totalorder %s17, 1
        %s226 = scalar_select %p225, %s17, 1
        %p227 = scmp.lt.s32.totalorder %s224, 0
        %s228 = scalar_select %p227, %s224, 0
        %s229 = smul.addr %s226, 2
        %s230 = sadd.s32 %s228, %s229
        %s231 = smul.addr %s230, 4
        %s232 = scalar_lea.vmem %s2, %s231
        %s233 = sadd.s32 %s18, %s19
      $region28: #{loss_function_forward.1} parent=15 // pred_fallthru
        _
      // Predicated region
      $region29: #{loss_function_forward.1} parent=15 // pred_check
        %p234 = pneg %p143
      $region30: #{loss_function_forward.1} parent=15 // pred_check_branch
        %236 = sbr.rel (%p234) target = $region32
      $region31: #{loss_function_forward.1} parent=15 // pred_region
        %s237 = sadd.s32 %s18, %s19
        %p238 = scmp.lt.s32.totalorder %s17, 1
        %s239 = scalar_select %p238, %s17, 1
        %p240 = scmp.lt.s32.totalorder %s237, 0
        %s241 = scalar_select %p240, %s237, 0
        %s242 = sadd.s32 %s241, %s239
        %s243 = smul.addr %s242, 4
        %s244 = scalar_lea.vmem %s3, %s243
        %s245 = sadd.s32 %s18, %s19
      $region32: #{loss_function_forward.1} parent=15 // pred_fallthru
        _
    $region16: #{loss_function_forward.1} parent=5 // pred_fallthru
      _
    %p246 = scmp.le.s32.totalorder 1, %s10
    %p247 = scmp.lt.s32.totalorder %s10, 3
    %p248 = pnand %p246, %p247
    %p249 = pneg %p248
    // Predicated region
    $region33: #{loss_function_forward.1} parent=5 // pred_check
      _
    $region34: #{loss_function_forward.1} parent=5 // pred_check_branch
      %251 = sbr.rel (%p248) target = $region36
    $region35: #{loss_function_forward.1} parent=5 // pred_region
      %s252 = ssub.s32 %s10, 1
      %s253 = sadd.s32 %s21, %s22
      %p254 = scmp.lt.s32.totalorder %s20, 1
      %s255 = scalar_select %p254, %s20, 1
      %p256 = scmp.lt.s32.totalorder %s253, 0
      %s257 = scalar_select %p256, %s253, 0
      %s258 = smul.addr %s255, 2
      %s259 = sadd.s32 %s257, %s258
      %s260 = smul.addr %s259, 4
      %s261 = scalar_lea.vmem %s0, %s260
      %p262 = pneg %p59
      %p263 = pneg %p56
      %s264 = sadd.s32 %s21, %s22
      %p265 = scmp.lt.s32.totalorder %s20, 1
      %s266 = scalar_select %p265, %s20, 1
      %p267 = scmp.lt.s32.totalorder %s264, 0
      %s268 = scalar_select %p267, %s264, 0
      %s269 = sadd.s32 %s268, %s266
      %s270 = smul.addr %s269, 4
      %s271 = scalar_lea.vmem %s1, %s270
      %p272 = pneg %p89
      %p273 = pneg %p86
      %s274 = sadd.s32 %s21, %s22
      %p275 = scmp.lt.s32.totalorder %s20, 1
      %s276 = scalar_select %p275, %s20, 1
      %p277 = scmp.lt.s32.totalorder %s274, 0
      %s278 = scalar_select %p277, %s274, 0
      %s279 = smul.addr %s276, 2
      %s280 = sadd.s32 %s278, %s279
      %s281 = smul.addr %s280, 4
      %s282 = scalar_lea.vmem %s2, %s281
      %p283 = pneg %p119
      %p284 = pneg %p116
      %s285 = sadd.s32 %s21, %s22
      %p286 = scmp.lt.s32.totalorder %s20, 1
      %s287 = scalar_select %p286, %s20, 1
      %p288 = scmp.lt.s32.totalorder %s285, 0
      %s289 = scalar_select %p288, %s285, 0
      %s290 = sadd.s32 %s289, %s287
      %s291 = smul.addr %s290, 4
      %s292 = scalar_lea.vmem %s3, %s291
      %p293 = pneg %p149
      %p294 = pneg %p146
      %p295 = pneg %p177
      %p296 = pneg %p174
      %p297 = scmp.lt.s32.totalorder %s20, 1
      %s298 = scalar_select %p297, %s20, 1
      %p299 = scmp.lt.s32.totalorder %s21, 0
      %s300 = scalar_select %p299, %s21, 0
      %s301 = smul.addr %s300, 2
      %s302 = smul.addr %s298, 2
      %s303 = sadd.s32 %s301, %s302
      %s304 = smul.addr %s303, 4
      %s305 = scalar_lea.vmem %s4, %s304
      %s306 = sadd.s32 %s21, %s22
      %p307 = scmp.lt.s32.totalorder %s20, 1
      %s308 = scalar_select %p307, %s20, 1
      %p309 = scmp.lt.s32.totalorder %s306, 0
      %s310 = scalar_select %p309, %s306, 0
      %s311 = smul.addr %s308, 2
      %s312 = sadd.s32 %s310, %s311
      %s313 = smul.addr %s312, 4
      %s314 = scalar_lea.vmem %s0, %s313
      %s315 = sadd.s32 %s21, %s22
      %s316 = sadd.s32 %s21, %s22
      %p317 = scmp.lt.s32.totalorder %s20, 1
      %s318 = scalar_select %p317, %s20, 1
      %p319 = scmp.lt.s32.totalorder %s316, 0
      %s320 = scalar_select %p319, %s316, 0
      %s321 = sadd.s32 %s320, %s318
      %s322 = smul.addr %s321, 4
      %s323 = scalar_lea.vmem %s1, %s322
      %s324 = sadd.s32 %s21, %s22
      %s325 = sadd.s32 %s21, %s22
      %p326 = scmp.lt.s32.totalorder %s20, 1
      %s327 = scalar_select %p326, %s20, 1
      %p328 = scmp.lt.s32.totalorder %s325, 0
      %s329 = scalar_select %p328, %s325, 0
      %s330 = smul.addr %s327, 2
      %s331 = sadd.s32 %s329, %s330
      %s332 = smul.addr %s331, 4
      %s333 = scalar_lea.vmem %s2, %s332
      %s334 = sadd.s32 %s21, %s22
      %s335 = sadd.s32 %s21, %s22
      %p336 = scmp.lt.s32.totalorder %s20, 1
      %s337 = scalar_select %p336, %s20, 1
      %p338 = scmp.lt.s32.totalorder %s335, 0
      %s339 = scalar_select %p338, %s335, 0
      %s340 = sadd.s32 %s339, %s337
      %s341 = smul.addr %s340, 4
      %s342 = scalar_lea.vmem %s3, %s341
      %s343 = sadd.s32 %s21, %s22
      %p344 = scmp.lt.s32.totalorder %s20, 1
      %s345 = scalar_select %p344, %s20, 1
      %p346 = scmp.lt.s32.totalorder %s21, 0
      %s347 = scalar_select %p346, %s21, 0
      %s348 = smul.addr %s347, 2
      %s349 = smul.addr %s345, 2
      %s350 = sadd.s32 %s348, %s349
      %s351 = smul.addr %s350, 4
      %s352 = scalar_lea.vmem %s4, %s351
      %p353 = scmp.eq.s32.totalorder %s22, 0
      // Predicated region
      $region37: #{loss_function_forward.1} parent=35 // pred_check
        %p354 = pneg %p353
      $region38: #{loss_function_forward.1} parent=35 // pred_check_branch
        %356 = sbr.rel (%p354) target = $region40
      $region39: #{loss_function_forward.1} parent=35 // pred_region
        %357 = vst [vmem:[%s352] sm:$0xf] 0.0
        %358 = vst [vmem:[%s352 + $0x4] sm:$0xf] 0.0
      $region40: #{loss_function_forward.1} parent=35 // pred_fallthru
        _
      %v359 = vld [vmem:[%s323] sm:$0xf]
      %vm360 = vcmp.ne.f32.partialorder %v359, 0.0
      %v361 = vld [vmem:[%s342] sm:$0xf]
      %vm362 = vcmp.gt.f32.partialorder %v361, 0.3
      %v363 = vld [vmem:[%s314] sm:$0xf]
      %s364 = scalar_lea.vmem %s314, 4
      %v365 = vld [vmem:[%s364] sm:$0xf]
      %v366 = vsub.f32 %v365, %v363
      %v367 = vsub.f32 0.0, %v366
      %v368 = vsel %vm360, %v366, %v367
      %v369 = vand.u32 2147483647, %v368
      %v370 = vsub.f32 0.0, %v369
      %v371 = vmul.f32 %v370, 1.442695
      %v372 = vpow.pop %v371
      %v373 = vadd.f32 %v372, 1.0
      %v374 = vrcp.pop %v373
      %vm375 = vcmp.ge.f32.partialorder %v368, 0.0
      %v376 = vsel %vm375, %v372, 1.0
      %v377 = vmul.f32 %v376, %v374
      %v378 = vsub.f32 0.0, %v368
      %v379 = vmax.f32 %v378, 0.0
      %v380 = vlog2.pop %v373
      %v381 = vmul.f32 %v380, 0.6931472
      %v382 = vadd.f32 %v379, %v381
      %v383 = vmul.f32 %v377, %v377
      %v384 = vmul.f32 %v383, %v382
      %v385 = vld [vmem:[%s333] sm:$0xf]
      %s386 = scalar_lea.vmem %s333, 4
      %v387 = vld [vmem:[%s386] sm:$0xf]
      %v388 = vsub.f32 %v387, %v385
      %v389 = vsub.f32 0.0, %v388
      %v390 = vsel %vm362, %v388, %v389
      %v391 = vand.u32 2147483647, %v390
      %v392 = vsub.f32 0.0, %v391
      %v393 = vmul.f32 %v392, 1.442695
      %v394 = vpow.pop %v393
      %v395 = vadd.f32 %v394, 1.0
      %v396 = vrcp.pop %v395
      %vm397 = vcmp.ge.f32.partialorder %v390, 0.0
      %v398 = vsel %vm397, %v394, 1.0
      %v399 = vmul.f32 %v398, %v396
      %v400 = vsub.f32 0.0, %v390
      %v401 = vmax.f32 %v400, 0.0
      %v402 = vlog2.pop %v395
      %v403 = vmul.f32 %v402, 0.6931472
      %v404 = vadd.f32 %v401, %v403
      %v405 = vmul.f32 %v399, %v399
      %v406 = vmul.f32 %v405, %v404
      %v407 = vld [vmem:[%s352] sm:$0xf]
      %v408 = vadd.f32 %v407, %v384
      %409 = vst [vmem:[%s352] sm:$0xf] %v408
      %s410 = scalar_lea.vmem %s352, 4
      %v411 = vld [vmem:[%s410] sm:$0xf]
      %v412 = vadd.f32 %v411, %v406
      %413 = vst [vmem:[%s410] sm:$0xf] %v412
      %p414 = scmp.lt.s32.totalorder %s20, 1
      %s415 = scalar_select %p414, %s20, 1
      %p416 = scmp.lt.s32.totalorder %s21, 0
      %s417 = scalar_select %p416, %s21, 0
      %s418 = smul.addr %s417, 2
      %s419 = smul.addr %s415, 2
      %s420 = sadd.s32 %s418, %s419
      %s421 = smul.addr %s420, 4
      %s422 = scalar_lea.vmem %s4, %s421
      // Predicated region
      $region41: #{loss_function_forward.1} parent=35 // pred_check
        %p423 = pneg %p174
      $region42: #{loss_function_forward.1} parent=35 // pred_check_branch
        %425 = sbr.rel (%p423) target = $region44
      $region43: #{loss_function_forward.1} parent=35 // pred_region
        _
      $region44: #{loss_function_forward.1} parent=35 // pred_fallthru
        _
    $region36: #{loss_function_forward.1} parent=5 // pred_fallthru
      _
    %p426 = scmp.le.s32.totalorder 2, %s10
    // Predicated region
    $region45: #{loss_function_forward.1} parent=5 // pred_check
      %p427 = pneg %p426
    $region46: #{loss_function_forward.1} parent=5 // pred_check_branch
      %429 = sbr.rel (%p427) target = $region48
    $region47: #{loss_function_forward.1} parent=5 // pred_region
      %s430 = ssub.s32 %s10, 2
      // Predicated region
      $region49: #{loss_function_forward.1} parent=47 // pred_check
        %p431 = pneg %p180
      $region50: #{loss_function_forward.1} parent=47 // pred_check_branch
        %433 = sbr.rel (%p431) target = $region52
      $region51: #{loss_function_forward.1} parent=47 // pred_region
        %p434 = scmp.lt.s32.totalorder %s23, 1
        %s435 = scalar_select %p434, %s23, 1
        %p436 = scmp.lt.s32.totalorder %s24, 0
        %s437 = scalar_select %p436, %s24, 0
        %s438 = smul.addr %s437, 2
        %s439 = smul.addr %s435, 2
        %s440 = sadd.s32 %s438, %s439
        %s441 = smul.addr %s440, 4
        %s442 = scalar_lea.vmem %s4, %s441
      $region52: #{loss_function_forward.1} parent=47 // pred_fallthru
        _
    $region48: #{loss_function_forward.1} parent=5 // pred_fallthru
      _
  $region6: #{loss_function_forward.1} parent=0 // loop_footer
    %s14 = sadd.s32 1, %s10
  $region7: #{loss_function_forward.1} parent=0 // loop_footer_branch
    %9 = sbr.rel target = $region3
  $region8: #{loss_function_forward.1} parent=0 // loop_exit
    _

</llo_original>
